<compile_context>
chip_gen: v7x
topology: tpu7x:2x2x1
jax: 0.10.0
libtpu: 0.0.40
codegen_flags: <defaults>
</compile_context>

<pallas_src>
import functools

import jax
import jax.numpy as jnp
from jax.experimental import pallas as pl
from jax.experimental.pallas import tpu as pltpu


def _round_up(n: int, m: int) -> int:
    return ((n + m - 1) // m) * m


def linear_kernel(x_ref, wt_ref, b_ref, o_ref, *, use_mxu: bool):
    x = x_ref[...]      # (TILE_B, IN)
    wt = wt_ref[...]    # (IN, OUT_PAD)
    b = b_ref[...]      # (1, OUT_PAD) -- broadcasts over the batch sublanes

    if use_mxu:
        # Real-sized contraction: use the MXU with f32 accumulation.
        acc = jnp.dot(x, wt, preferred_element_type=jnp.float32)
    else:
        # Degenerate shape (tiny IN / OUT): a (TILE_B x IN)@(IN x OUT) matmul
        # would use ~IN/128 of the MXU K dim for full push/pop latency.
        # Unrolled broadcast multiply-adds on the VPU instead.
        in_size = x.shape[1]
        acc = x[:, 0:1] * wt[0:1, :]              # (TILE_B,1)*(1,OUT_PAD)
        for k in range(1, in_size):                # trace-time unroll (IN small)
            acc = acc + x[:, k:k + 1] * wt[k:k + 1, :]

    o_ref[...] = (acc + b).astype(o_ref.dtype)


def prepare_linear_params(weight, bias, out_pad: int):
    """One-time parameter prep (keep outside the per-call hot path for real
    models): transpose W to (IN, OUT) and zero-pad OUT to a lane-dense
    multiple of 128; pad bias to match."""
    output_size, input_size = weight.shape
    wt = jnp.zeros((input_size, out_pad), dtype=jnp.float32)
    wt = wt.at[:, :output_size].set(weight.T.astype(jnp.float32))
    b = jnp.zeros((1, out_pad), dtype=jnp.float32)
    b = b.at[0, :output_size].set(bias.astype(jnp.float32))
    return wt, b


def lr_forward(x, weight, bias, *, tile_b: int = 512):
    """Pallas equivalent of nn.Linear(input_size, output_size).forward(x).

    x:      (batch, input_size)        float32
    weight: (output_size, input_size)  float32  (PyTorch convention)
    bias:   (output_size,)             float32
    returns (batch, output_size)       float32
    """
    batch, input_size = x.shape
    output_size = weight.shape[0]

    # Lane-dense output slab: multiple of 128 => unmasked full-vreg stores.
    out_pad = _round_up(output_size, 128)
    # Sublane-aligned batch tiles (multiple of 8), capped at `tile_b` rows.
    tile_b = min(tile_b, _round_up(batch, 8))
    batch_pad = _round_up(batch, tile_b)

    wt_p, b_p = prepare_linear_params(weight, bias, out_pad)

    x_p = x.astype(jnp.float32)
    if batch_pad != batch:
        x_p = jnp.pad(x_p, ((0, batch_pad - batch), (0, 0)))

    # MXU only pays off when both the contraction (K=IN) and output (N=OUT)
    # dims are large enough to fill the systolic array.
    use_mxu = (input_size >= 128) and (output_size >= 128)
    # TODO(synk): for very large input_size a K-tiling grid axis (with a VMEM
    # accumulator) would be needed; not relevant for this 2-feature model.

    kernel = functools.partial(linear_kernel, use_mxu=use_mxu)

    out_p = pl.pallas_call(
        kernel,
        out_shape=jax.ShapeDtypeStruct((batch_pad, out_pad), jnp.float32),
        grid=(batch_pad // tile_b,),
        in_specs=[
            pl.BlockSpec((tile_b, input_size), lambda i: (i, 0)),
            pl.BlockSpec((input_size, out_pad), lambda i: (0, 0)),
            pl.BlockSpec((1, out_pad), lambda i: (0, 0)),
        ],
        out_specs=pl.BlockSpec((tile_b, out_pad), lambda i: (i, 0)),
        compiler_params=pltpu.CompilerParams(
            dimension_semantics=("parallel",),
        ),
    )(x_p, wt_p, b_p)

    # Slice the real rows / columns back out of the padded slab.
    return out_p[:batch, :output_size]


if __name__ == "__main__":
    # The original script feeds x = data[['YearStart', 'Education']] -> IN=2,
    # regression target (obesity value) -> OUT=1.
    batch = 8
    input_size = 2
    output_size = 1

    key = jax.random.PRNGKey(0)
    kx, kw, kb = jax.random.split(key, 3)

    x = jax.random.normal(kx, (batch, input_size), dtype=jnp.float32)
    # Mimic nn.Linear's uniform(-1/sqrt(fan_in), 1/sqrt(fan_in)) init.
    bound = 1.0 / (input_size ** 0.5)
    weight = jax.random.uniform(
        kw, (output_size, input_size), dtype=jnp.float32,
        minval=-bound, maxval=bound,
    )
    bias = jax.random.uniform(
        kb, (output_size,), dtype=jnp.float32, minval=-bound, maxval=bound,
    )

    out = lr_forward(x, weight, bias)
    out = jax.block_until_ready(out)

    # Cross-check against plain JAX reference (same semantics as nn.Linear).
    ref = x @ weight.T + bias
    assert out.shape == (batch, output_size)
    assert jnp.allclose(out, ref, atol=1e-5, rtol=1e-5)

    # Also exercise a larger, padded-batch case to validate the batch grid.
    kx2 = jax.random.fold_in(kx, 1)
    x_big = jax.random.normal(kx2, (1000, input_size), dtype=jnp.float32)
    out_big = jax.block_until_ready(lr_forward(x_big, weight, bias))
    ref_big = x_big @ weight.T + bias
    assert out_big.shape == (1000, output_size)
    assert jnp.allclose(out_big, ref_big, atol=1e-5, rtol=1e-5)

    print("KERNEL_OK")
</pallas_src>

<mosaic_0001>
module attributes {stable_mosaic.version = 11 : i64} {
  func.func @linear_kernel(%arg0: i32, %arg1: memref<8x2xf32, #tpu.memory_space<vmem>>, %arg2: memref<2x128xf32, #tpu.memory_space<vmem>>, %arg3: memref<1x128xf32, #tpu.memory_space<vmem>>, %arg4: memref<8x128xf32, #tpu.memory_space<vmem>>) attributes {dimension_semantics = [#tpu.dimension_semantics<parallel>], iteration_bounds = array<i64: 1>, scalar_prefetch = 0 : i64, scratch_operands = 0 : i64, tpu.core_type = #tpu.core_type<tc>, window_params = [{transform_indices = @transform_0, window_bounds = array<i64: 8, 2>}, {pipeline_mode = #tpu.pipeline_mode<synchronous>, transform_indices = @transform_1, window_bounds = array<i64: 2, 128>}, {pipeline_mode = #tpu.pipeline_mode<synchronous>, transform_indices = @transform_2, window_bounds = array<i64: 1, 128>}, {transform_indices = @transform_3, window_bounds = array<i64: 8, 128>}]} {
    %c0 = arith.constant 0 : index
    %c0_0 = arith.constant 0 : index
    %0 = vector.load %arg1[%c0, %c0_0] : memref<8x2xf32, #tpu.memory_space<vmem>>, vector<8x2xf32>
    %c0_1 = arith.constant 0 : index
    %c0_2 = arith.constant 0 : index
    %1 = vector.load %arg2[%c0_1, %c0_2] : memref<2x128xf32, #tpu.memory_space<vmem>>, vector<2x128xf32>
    %c0_3 = arith.constant 0 : index
    %c0_4 = arith.constant 0 : index
    %2 = vector.load %arg3[%c0_3, %c0_4] : memref<1x128xf32, #tpu.memory_space<vmem>>, vector<1x128xf32>
    %3 = vector.extract_strided_slice %0 {offsets = [0, 0], sizes = [8, 1], strides = [1, 1]} : vector<8x2xf32> to vector<8x1xf32>
    %4 = vector.extract_strided_slice %1 {offsets = [0, 0], sizes = [1, 128], strides = [1, 1]} : vector<2x128xf32> to vector<1x128xf32>
    %5 = vector.broadcast %3 : vector<8x1xf32> to vector<8x128xf32>
    %6 = vector.broadcast %4 : vector<1x128xf32> to vector<8x128xf32>
    %7 = arith.mulf %5, %6 : vector<8x128xf32>
    %8 = vector.extract_strided_slice %0 {offsets = [0, 1], sizes = [8, 1], strides = [1, 1]} : vector<8x2xf32> to vector<8x1xf32>
    %9 = vector.extract_strided_slice %1 {offsets = [1, 0], sizes = [1, 128], strides = [1, 1]} : vector<2x128xf32> to vector<1x128xf32>
    %10 = vector.broadcast %8 : vector<8x1xf32> to vector<8x128xf32>
    %11 = vector.broadcast %9 : vector<1x128xf32> to vector<8x128xf32>
    %12 = arith.mulf %10, %11 : vector<8x128xf32>
    %13 = arith.addf %7, %12 : vector<8x128xf32>
    %14 = vector.broadcast %2 : vector<1x128xf32> to vector<8x128xf32>
    %15 = arith.addf %13, %14 : vector<8x128xf32>
    %c0_5 = arith.constant 0 : index
    %c0_6 = arith.constant 0 : index
    %16 = vector.load %arg4[%c0_5, %c0_6] : memref<8x128xf32, #tpu.memory_space<vmem>>, vector<8x128xf32>
    tpu.vector_store %arg4[%c0_5, %c0_6], %15 {strides = array<i32>} : memref<8x128xf32, #tpu.memory_space<vmem>>, vector<8x128xf32>,
    return
  }
  func.func @transform_0(%arg0: i32) -> (i32, i32) {
    %c0_i32 = arith.constant 0 : i32
    %c0_i32_0 = arith.constant 0 : i32
    return %arg0, %c0_i32 : i32, i32
  }
  func.func @transform_1(%arg0: i32) -> (i32, i32) {
    %c0_i32 = arith.constant 0 : i32
    %c0_i32_0 = arith.constant 0 : i32
    %c0_i32_1 = arith.constant 0 : i32
    return %c0_i32, %c0_i32_0 : i32, i32
  }
  func.func @transform_2(%arg0: i32) -> (i32, i32) {
    %c0_i32 = arith.constant 0 : i32
    %c0_i32_0 = arith.constant 0 : i32
    %c0_i32_1 = arith.constant 0 : i32
    return %c0_i32, %c0_i32_0 : i32, i32
  }
  func.func @transform_3(%arg0: i32) -> (i32, i32) {
    %c0_i32 = arith.constant 0 : i32
    %c0_i32_0 = arith.constant 0 : i32
    return %arg0, %c0_i32 : i32, i32
  }
}

</mosaic_0001>

<llo_original>
// kernel: tpu_custom_call.1
$region0: #{tpu_custom_call.1}
  #allocation0 [shape = 'u32[]', space=smem, size = 0x4, offset = 0x4, fixed_abs, tag = 'smem constant byte address 0x4 - core index']
  #allocation1 [shape = 'u32[144,128]{1,0:T(1,128)}', space=vmem, size = 0x12000, scoped, tag = 'internal scratch']
  %s0 = inlined_call_operand.vmem [shape: f32[8,2], index: 0, kind: input, shape index: {}]
  %s1 = inlined_call_operand.vmem [shape: f32[2,128], index: 1, kind: input, shape index: {}]
  %s2 = inlined_call_operand.vmem [shape: f32[1,128], index: 2, kind: input, shape index: {}]
  %s3 = inlined_call_operand.hbm [shape: f32[8,128], index: 3, kind: output, shape index: {}]
  %s4 = sld [smem:[#allocation0]]
  $region22: #{tpu_custom_call.1} parent=0
    _
  %s6 = ssub.s32 1, %s4
  %s7 = scalar_select 0, %s6, %s4
  $region1: #{tpu_custom_call.1} parent=0
    #allocation2 [shape = 'u8[4096]{0}', space=vmem, size = 0x1000, scoped, tag = 'output window, operand 0, single buffered']
    #allocation3 [shape = 's32[1]{0}', space=sflag, size = 0x4, scoped, tag = 'scoped memory for tpu_custom_call.1']
    %8 = vsyncpa [#allocation3], 0
    // Predicated region
    $region2: #{tpu_custom_call.1} parent=1 // pred_check
      _
    $region3: #{tpu_custom_call.1} parent=1 // pred_check_branch
      %10 = sbr.rel (0) target = $region5
    $region4: #{tpu_custom_call.1} parent=1 // pred_region
      _
    $region5: #{tpu_custom_call.1} parent=1 // pred_fallthru
      _
    // Predicated region
    $region6: #{tpu_custom_call.1} parent=1 // pred_check
      _
    $region7: #{tpu_custom_call.1} parent=1 // pred_check_branch
      %12 = sbr.rel (0) target = $region9
    $region8: #{tpu_custom_call.1} parent=1 // pred_region
      _
    $region9: #{tpu_custom_call.1} parent=1 // pred_fallthru
      _
    // Predicated region
    $region10: #{tpu_custom_call.1} parent=1 // pred_check
      _
    $region11: #{tpu_custom_call.1} parent=1 // pred_check_branch
      %14 = sbr.rel (0) target = $region13
    $region12: #{tpu_custom_call.1} parent=1 // pred_region
      _
    $region13: #{tpu_custom_call.1} parent=1 // pred_fallthru
      _
    %v15 = vld [vmem:[%s0] sm:$0xff]
    %v16 = vld [vmem:[%s1] sm:$0x3]
    %v17 = vld [vmem:[%s2] sm:$0x1]
    %19 = vset.pattern.permute.xlu0 0
    %20 = vperm.xlu0 %19, %v15
    %v21 = vpop.permute.xlu0 %20
    %v23 = vlaneseq
    %v24 = vshrl.u32 %v23, 7
    %v25 = vsub.s32 0, %v24
    %v26 = vrot.slane %v16, %v25
    %v27 = vmul.f32 %v21, %v26
    %28 = vset.pattern.permute.xlu0 1
    %29 = vperm.xlu0 %28, %v15
    %v30 = vpop.permute.xlu0 %29
    %v32 = vlaneseq
    %v33 = vshrl.u32 %v32, 7
    %v34 = vsub.s32 1, %v33
    %v35 = vrot.slane %v16, %v34
    %v36 = vmul.f32 %v30, %v35
    %v37 = vadd.f32 %v27, %v36
    %v39 = vlaneseq
    %v40 = vshrl.u32 %v39, 7
    %v41 = vsub.s32 0, %v40
    %v42 = vrot.slane %v17, %v41
    %v44 = vadd.f32 %v37, %v42
    %45 = vst [vmem:[#allocation2] sm:$0xff] %v44
    // Predicated region
    $region14: #{tpu_custom_call.1} parent=1 // pred_check
      _
    $region15: #{tpu_custom_call.1} parent=1 // pred_check_branch
      %47 = sbr.rel (0) target = $region17
    $region16: #{tpu_custom_call.1} parent=1 // pred_region
      %s49 = ssub.s32 128, 128
      %50 = vsyncadd [#allocation3], %s49
      %s52 = sshll.u32 [#allocation2], 4
      %s53 = int_to_ptr.vmem [resolvable:$true] %s52
      %55 = dma.vmem_to_hbm [thread:$0]  %s53, 128, %s3, [#allocation3]
    $region17: #{tpu_custom_call.1} parent=1 // pred_fallthru
      _
    // Predicated region
    $region18: #{tpu_custom_call.1} parent=1 // pred_check
      _
    $region19: #{tpu_custom_call.1} parent=1 // pred_check_branch
      %57 = sbr.rel (0) target = $region21
    $region20: #{tpu_custom_call.1} parent=1 // pred_region
      %58 = dma.done [#allocation3], 128
    $region21: #{tpu_custom_call.1} parent=1 // pred_fallthru
      _
    %59 = vsyncpa [#allocation3], 1

</llo_original>
